<compile_context>
chip_gen: v7x
topology: tpu7x:2x2x1
jax: 0.10.0
libtpu: 0.0.40
codegen_flags: <defaults>
</compile_context>

<pallas_src>
import math

import jax
import jax.numpy as jnp
from jax.experimental import pallas as pl
from jax.experimental.pallas import tpu as pltpu


def _build_pe_table(d_model: int, max_len: int = 512) -> jnp.ndarray:
    """Deterministic buffer init, identical to the PyTorch __init__."""
    position = jnp.arange(0, max_len, dtype=jnp.float32)[:, None]            # (max_len, 1)
    div_term = jnp.exp(jnp.arange(0, d_model, 2, dtype=jnp.float32)
                       * (-math.log(10000.0) / d_model))                      # (d_model/2,)
    pe = jnp.zeros((max_len, d_model), dtype=jnp.float32)
    pe = pe.at[:, 0::2].set(jnp.sin(position * div_term))
    pe = pe.at[:, 1::2].set(jnp.cos(position * div_term))
    # unsqueeze(0).transpose(0,1) -> (max_len, 1, d_model)
    return pe[:, None, :]


def _pos_enc_kernel(x_ref, pe_ref, o_ref):
    # All refs are (TS, B*D) tiles; pure element-wise add (mem-bound).
    o_ref[...] = x_ref[...] + pe_ref[...]


def _choose_tile_s(S: int, row_bytes: int, target_bytes: int = 4 << 20) -> int:
    """Largest row-tile ~target_bytes, multiple of 8 (sublane), capped at S.

    With ~4 MiB per tile and three tiles (x, pe, out) double-buffered, peak VMEM
    stays around 24 MiB -- inside the 32 MiB scoped default on every generation
    (incl. v7x's 64 MiB physical VMEM), while per-step overhead (~0.35 us) is
    negligible vs. the ~MiB-scale DMA per step.
    """
    ts = max(8, target_bytes // max(row_bytes, 1))
    ts = (ts // 8) * 8
    if ts >= S:
        return S  # single (or final) full-extent block; S=multiple of 8 in practice
    return int(ts)


def positional_encoding(x: jnp.ndarray, pe: jnp.ndarray) -> jnp.ndarray:
    """x: (S, B, D); pe: (max_len, 1, D). Returns x + pe[:S] (broadcast over B)."""
    S, B, D = x.shape
    max_len = pe.shape[0]
    BD = B * D

    # Lane-dense view of x / out: last dim is B*D instead of D.
    x2 = x.reshape(S, BD)
    # Pre-tile pe along batch so pe2[s, b*D + d] == pe[s, 0, d]; the kernel then
    # needs no in-kernel broadcast/relayout. Tiny table (max_len*B*D), cast to
    # the activation dtype so bf16 runs move half the bytes.
    pe2 = jnp.tile(pe[:, 0, :], (1, B)).astype(x.dtype)          # (max_len, B*D)

    TS = _choose_tile_s(S, row_bytes=BD * x.dtype.itemsize)
    grid = (pl.cdiv(S, TS),)

    out2 = pl.pallas_call(
        _pos_enc_kernel,
        out_shape=jax.ShapeDtypeStruct((S, BD), x.dtype),
        grid_spec=pltpu.PrefetchScalarGridSpec(
            num_scalar_prefetch=0,
            grid=grid,
            in_specs=[
                pl.BlockSpec((TS, BD), lambda s: (s, 0)),   # x tile
                pl.BlockSpec((TS, BD), lambda s: (s, 0)),   # pe window via index_map (no pe[:S] slice)
            ],
            out_specs=pl.BlockSpec((TS, BD), lambda s: (s, 0)),
        ),
        compiler_params=pltpu.CompilerParams(
            # Independent output tiles -> legally parallel; shards across both
            # TensorCores on v7x, harmless on single-TC v5e/v6e.
            dimension_semantics=("parallel",),
        ),
        # TODO(synk): for very large activations, add input_output_aliases={0: 0}
        # to do the add in place on x (donation semantics at the call site).
    )(x2, pe2)

    return out2.reshape(S, B, D)


if __name__ == "__main__":
    d_model = 32
    max_len = 512
    seq_len = 8
    batch = 2

    key = jax.random.PRNGKey(0)
    x = jax.random.normal(key, (seq_len, batch, d_model), dtype=jnp.float32)

    pe = _build_pe_table(d_model, max_len)

    out = positional_encoding(x, pe)
    out = jax.block_until_ready(out)

    # Reference check (pure JAX) for sanity.
    ref = x + pe[:seq_len]
    assert out.shape == (seq_len, batch, d_model)
    assert jnp.allclose(out, ref, atol=1e-6), "mismatch vs reference"

    print("KERNEL_OK")
</pallas_src>

<mosaic_0001>
module attributes {stable_mosaic.version = 11 : i64} {
  func.func @_pos_enc_kernel(%arg0: i32, %arg1: memref<8x64xf32, #tpu.memory_space<vmem>>, %arg2: memref<8x64xf32, #tpu.memory_space<vmem>>, %arg3: memref<8x64xf32, #tpu.memory_space<vmem>>) attributes {dimension_semantics = [#tpu.dimension_semantics<parallel>], iteration_bounds = array<i64: 1>, scalar_prefetch = 0 : i64, scratch_operands = 0 : i64, tpu.core_type = #tpu.core_type<tc>, window_params = [{transform_indices = @transform_0, window_bounds = array<i64: 8, 64>}, {transform_indices = @transform_1, window_bounds = array<i64: 8, 64>}, {transform_indices = @transform_2, window_bounds = array<i64: 8, 64>}]} {
    %c0 = arith.constant 0 : index
    %c0_0 = arith.constant 0 : index
    %0 = vector.load %arg1[%c0, %c0_0] : memref<8x64xf32, #tpu.memory_space<vmem>>, vector<8x64xf32>
    %c0_1 = arith.constant 0 : index
    %c0_2 = arith.constant 0 : index
    %1 = vector.load %arg2[%c0_1, %c0_2] : memref<8x64xf32, #tpu.memory_space<vmem>>, vector<8x64xf32>
    %2 = arith.addf %0, %1 : vector<8x64xf32>
    %c0_3 = arith.constant 0 : index
    %c0_4 = arith.constant 0 : index
    %3 = vector.load %arg3[%c0_3, %c0_4] : memref<8x64xf32, #tpu.memory_space<vmem>>, vector<8x64xf32>
    tpu.vector_store %arg3[%c0_3, %c0_4], %2 {strides = array<i32>} : memref<8x64xf32, #tpu.memory_space<vmem>>, vector<8x64xf32>,
    return
  }
  func.func @transform_0(%arg0: i32) -> (i32, i32) {
    %c0_i32 = arith.constant 0 : i32
    %c0_i32_0 = arith.constant 0 : i32
    return %arg0, %c0_i32 : i32, i32
  }
  func.func @transform_1(%arg0: i32) -> (i32, i32) {
    %c0_i32 = arith.constant 0 : i32
    %c0_i32_0 = arith.constant 0 : i32
    return %arg0, %c0_i32 : i32, i32
  }
  func.func @transform_2(%arg0: i32) -> (i32, i32) {
    %c0_i32 = arith.constant 0 : i32
    %c0_i32_0 = arith.constant 0 : i32
    return %arg0, %c0_i32 : i32, i32
  }
}

</mosaic_0001>

<llo_original>
// kernel: tpu_custom_call.1
$region0: #{tpu_custom_call.1}
  #allocation0 [shape = 'u32[]', space=smem, size = 0x4, offset = 0x4, fixed_abs, tag = 'smem constant byte address 0x4 - core index']
  #allocation1 [shape = 'u32[144,128]{1,0:T(1,128)}', space=vmem, size = 0x12000, scoped, tag = 'internal scratch']
  %s0 = inlined_call_operand.vmem [shape: f32[8,64], index: 0, kind: input, shape index: {}]
  %s1 = inlined_call_operand.vmem [shape: f32[512,64], index: 1, kind: input, shape index: {}]
  %s2 = inlined_call_operand.hbm [shape: f32[8,64], index: 2, kind: output, shape index: {}]
  %s3 = sld [smem:[#allocation0]]
  $region18: #{tpu_custom_call.1} parent=0
    _
  %s5 = ssub.s32 1, %s3
  %s6 = scalar_select 0, %s5, %s3
  $region1: #{tpu_custom_call.1} parent=0
    #allocation2 [shape = 'u8[4096]{0}', space=vmem, size = 0x1000, scoped, tag = 'output window, operand 0, single buffered']
    #allocation3 [shape = 's32[1]{0}', space=sflag, size = 0x4, scoped, tag = 'scoped memory for tpu_custom_call.1']
    %7 = vsyncpa [#allocation3], 0
    // Predicated region
    $region2: #{tpu_custom_call.1} parent=1 // pred_check
      _
    $region3: #{tpu_custom_call.1} parent=1 // pred_check_branch
      %9 = sbr.rel (0) target = $region5
    $region4: #{tpu_custom_call.1} parent=1 // pred_region
      _
    $region5: #{tpu_custom_call.1} parent=1 // pred_fallthru
      _
    // Predicated region
    $region6: #{tpu_custom_call.1} parent=1 // pred_check
      _
    $region7: #{tpu_custom_call.1} parent=1 // pred_check_branch
      %11 = sbr.rel (0) target = $region9
    $region8: #{tpu_custom_call.1} parent=1 // pred_region
      _
    $region9: #{tpu_custom_call.1} parent=1 // pred_fallthru
      _
    %v12 = vld [vmem:[%s0] sm:$0xff]
    %v13 = vld [vmem:[%s1] sm:$0xff]
    %v14 = vadd.f32 %v12, %v13
    %vm15 = vcmask 523264
    %16 = vst.msk [vmem:[#allocation2] sm:$0xff] %vm15, %v14
    // Predicated region
    $region10: #{tpu_custom_call.1} parent=1 // pred_check
      _
    $region11: #{tpu_custom_call.1} parent=1 // pred_check_branch
      %18 = sbr.rel (0) target = $region13
    $region12: #{tpu_custom_call.1} parent=1 // pred_region
      %s20 = ssub.s32 128, 128
      %21 = vsyncadd [#allocation3], %s20
      %s23 = sshll.u32 [#allocation2], 4
      %s24 = int_to_ptr.vmem [resolvable:$true] %s23
      %26 = dma.vmem_to_hbm [thread:$0]  %s24, 128, %s2, [#allocation3]
    $region13: #{tpu_custom_call.1} parent=1 // pred_fallthru
      _
    // Predicated region
    $region14: #{tpu_custom_call.1} parent=1 // pred_check
      _
    $region15: #{tpu_custom_call.1} parent=1 // pred_check_branch
      %28 = sbr.rel (0) target = $region17
    $region16: #{tpu_custom_call.1} parent=1 // pred_region
      %29 = dma.done [#allocation3], 128
    $region17: #{tpu_custom_call.1} parent=1 // pred_fallthru
      _
    %30 = vsyncpa [#allocation3], 1

</llo_original>
